<compile_context>
chip_gen: v7x
topology: tpu7x:2x2x1
jax: 0.10.0
libtpu: 0.0.40
codegen_flags: <defaults>
</compile_context>

<pallas_src>
import jax
import jax.numpy as jnp
from jax.experimental import pallas as pl
from jax.experimental.pallas import tpu as pltpu

HIDDEN = 768  # fc_1 output width (fixed by the module)


def _rank1_head_kernel(x_ref, w_ref, b_ref, o_ref):
    # x_ref: (tm, in_size)  input rows (caller dtype)
    # w_ref: (1, in_size)   fused weight row == (W1^T @ W2^T)^T, in fc_1.weight dtype
    # b_ref: (1,) in SMEM   fused bias scalar == b1 @ W2^T + b2  (f32)
    # o_ref: (tm, 1)
    x = x_ref[...]
    w = w_ref[...]
    if x.dtype != w.dtype:
        x = x.astype(w.dtype)  # mirrors `output.to(self.fc_1.weight.dtype)`
    # VPU multiply in the weight dtype, f32 accumulation on the lane reduction.
    r = jnp.sum(x * w, axis=-1, keepdims=True, dtype=jnp.float32) + b_ref[0]
    o_ref[...] = r.astype(o_ref.dtype)


def fold_ranking_value_head_params(w1t, b1, w2t, b2):
    """Fold fc_2 into fc_1 (valid: no activation in between, dropout = Identity).

    Callers with static weights should hoist this out of the per-forward path.
    """
    w_eff = jnp.dot(w1t.astype(jnp.float32), w2t.astype(jnp.float32))   # (in_size, 1)
    b_eff = jnp.dot(b1.astype(jnp.float32), w2t.astype(jnp.float32))    # (1,)
    b_eff = (b_eff + b2.astype(jnp.float32)).reshape(1)                  # keep f32
    w_row = w_eff.reshape(1, -1).astype(w1t.dtype)                       # (1, in_size)
    return w_row, b_eff


def _choose_tm(M, in_size, itemsize, *, target_tile_bytes=4 << 20, min_tm=256):
    """Pick the row tile: ~4 MiB x-tiles, multiple of 8, grid_m >= 2 when possible."""
    row_bytes = max(1, in_size * itemsize)
    tm = max(min_tm, (target_tile_bytes // row_bytes) // 8 * 8)
    if M > 2 * min_tm:
        # Keep at least two grid steps so v7x can shard rows across both TensorCores.
        half = (pl.cdiv(M, 2) + 7) // 8 * 8
        tm = min(tm, max(min_tm, half))
    # Never larger than the (8-rounded) row count.
    tm = min(tm, max(8, (M + 7) // 8 * 8))
    return int(tm)


def _vmem_limit_bytes(tm, in_size, x_itemsize):
    tile = tm * in_size
    budget = 2 * tile * x_itemsize            # double-buffered x blocks
    budget += 2 * tile * 4                    # in-kernel product / f32 temporaries
    budget += 8 * in_size * 4 + (256 << 10)   # fused weight row, output blocks, slack
    try:
        cap = pltpu.get_tpu_info().vmem_capacity_bytes
    except Exception:
        cap = 64 << 20  # conservative: v7x per-TC VMEM
    cap = max(16 << 20, cap - (8 << 20))      # leave headroom for the compiler
    return int(min(cap, max(16 << 20, budget)))


def ranking_value_head(logits, w1t, b1, w2t, b2, *, tm=None):
    """logits: (B, S, input_size) -> (B, S, 1). Matches fc_2(fc_1(dropout(x)))."""
    B, S, in_size = logits.shape
    M = B * S
    out_dtype = w1t.dtype

    w_row, b_eff = fold_ranking_value_head_params(w1t, b1, w2t, b2)

    # Flatten only (free); no padding of x -- the final ragged block reads garbage rows
    # that are per-row independent and sliced off the output below.
    x = logits.reshape(M, in_size)

    if tm is None:
        tm = _choose_tm(M, in_size, x.dtype.itemsize)
    grid_m = pl.cdiv(M, tm)
    m_pad = grid_m * tm  # output allocated padded (tiny: m_pad * itemsize bytes), never x

    vmem_limit = _vmem_limit_bytes(tm, in_size, x.dtype.itemsize)

    cost = pl.CostEstimate(
        flops=2 * M * in_size,
        transcendentals=0,
        bytes_accessed=M * in_size * x.dtype.itemsize
        + in_size * w_row.dtype.itemsize
        + M * jnp.dtype(out_dtype).itemsize,
    )

    out = pl.pallas_call(
        _rank1_head_kernel,
        out_shape=jax.ShapeDtypeStruct((m_pad, 1), out_dtype),
        grid=(grid_m,),
        in_specs=[
            pl.BlockSpec((tm, in_size), lambda i: (i, 0)),        # x rows (pipelined, ragged tail)
            pl.BlockSpec((1, in_size), lambda i: (0, 0)),         # fused weight row (fetched once)
            pl.BlockSpec(memory_space=pltpu.MemorySpace.SMEM),    # fused bias scalar
        ],
        out_specs=pl.BlockSpec((tm, 1), lambda i: (i, 0)),
        compiler_params=pltpu.CompilerParams(
            dimension_semantics=("parallel",),  # lets v7x shard row tiles across its 2 TCs
            vmem_limit_bytes=vmem_limit,
        ),
        cost_estimate=cost,
    )(x, w_row, b_eff)

    if m_pad != M:
        out = out[:M]  # drop rows produced from the undefined ragged tail
    return out.reshape(B, S, 1)


def reference(logits, w1t, b1, w2t, b2):
    """Unfused two-matmul reference (exactly the module's forward)."""
    x = logits.reshape(-1, logits.shape[-1]).astype(w1t.dtype)
    h = x @ w1t + b1
    out = h @ w2t + b2
    return out.reshape(*logits.shape[:-1], 1)


if __name__ == "__main__":
    key = jax.random.PRNGKey(0)
    k_x, k_w1, k_b1, k_w2, k_b2 = jax.random.split(key, 5)

    batch, seq, input_size = 2, 8, 32  # small demo shapes; input_size = module's input_size

    logits = jax.random.normal(k_x, (batch, seq, input_size), dtype=jnp.float32)

    # Synthetic parameters with nn.Linear(input_size, 768) / nn.Linear(768, 1) shapes,
    # stored pre-transposed as (in, out).
    w1t = jax.random.normal(k_w1, (input_size, HIDDEN), dtype=jnp.float32) * (1.0 / input_size**0.5)
    b1 = jax.random.normal(k_b1, (HIDDEN,), dtype=jnp.float32) * 0.01
    w2t = jax.random.normal(k_w2, (HIDDEN, 1), dtype=jnp.float32) * (1.0 / HIDDEN**0.5)
    b2 = jax.random.normal(k_b2, (1,), dtype=jnp.float32) * 0.01

    out = ranking_value_head(logits, w1t, b1, w2t, b2)
    out = jax.block_until_ready(out)

    ref = reference(logits, w1t, b1, w2t, b2)
    assert out.shape == (batch, seq, 1)
    # Note: the fold changes summation order vs the sequential two-matmul module,
    # so compare with a small tolerance (exact at f32 scale used here).
    assert jnp.allclose(out, ref, atol=1e-3, rtol=1e-3), "mismatch vs reference"

    print("KERNEL_OK")
</pallas_src>

<mosaic_0001>
module attributes {stable_mosaic.version = 11 : i64} {
  func.func @_rank1_head_kernel(%arg0: i32, %arg1: memref<16x32xf32, #tpu.memory_space<vmem>>, %arg2: memref<1x32xf32, #tpu.memory_space<vmem>>, %arg3: memref<1xf32, #tpu.memory_space<smem>>, %arg4: memref<16x1xf32, #tpu.memory_space<vmem>>) attributes {dimension_semantics = [#tpu.dimension_semantics<parallel>], iteration_bounds = array<i64: 1>, scalar_prefetch = 0 : i64, scratch_operands = 0 : i64, tpu.core_type = #tpu.core_type<tc>, window_params = [{transform_indices = @transform_0, window_bounds = array<i64: 16, 32>}, {pipeline_mode = #tpu.pipeline_mode<synchronous>, transform_indices = @transform_1, window_bounds = array<i64: 1, 32>}, {transform_indices = @transform_2, window_bounds = array<i64: 1>}, {transform_indices = @transform_3, window_bounds = array<i64: 16, 1>}]} {
    %c0 = arith.constant 0 : index
    %c0_0 = arith.constant 0 : index
    %0 = vector.load %arg1[%c0, %c0_0] : memref<16x32xf32, #tpu.memory_space<vmem>>, vector<16x32xf32>
    %c0_1 = arith.constant 0 : index
    %c0_2 = arith.constant 0 : index
    %1 = vector.load %arg2[%c0_1, %c0_2] : memref<1x32xf32, #tpu.memory_space<vmem>>, vector<1x32xf32>
    %2 = vector.broadcast %1 : vector<1x32xf32> to vector<16x32xf32>
    %3 = arith.mulf %0, %2 : vector<16x32xf32>
    %cst = arith.constant dense<0.000000e+00> : vector<16xf32>
    %4 = vector.multi_reduction <add>, %3, %cst [1] : vector<16x32xf32> to vector<16xf32>
    %5 = vector.shape_cast %4 : vector<16xf32> to vector<16x1xf32>
    %c0_3 = arith.constant 0 : index
    %6 = memref.load %arg3[%c0_3] : memref<1xf32, #tpu.memory_space<smem>>
    %7 = vector.broadcast %6 : f32 to vector<16x1xf32>
    %8 = arith.addf %5, %7 : vector<16x1xf32>
    %c0_4 = arith.constant 0 : index
    %c0_5 = arith.constant 0 : index
    %9 = vector.load %arg4[%c0_4, %c0_5] : memref<16x1xf32, #tpu.memory_space<vmem>>, vector<16x1xf32>
    tpu.vector_store %arg4[%c0_4, %c0_5], %8 {strides = array<i32>} : memref<16x1xf32, #tpu.memory_space<vmem>>, vector<16x1xf32>,
    return
  }
  func.func @transform_0(%arg0: i32) -> (i32, i32) {
    %c0_i32 = arith.constant 0 : i32
    %c0_i32_0 = arith.constant 0 : i32
    return %arg0, %c0_i32 : i32, i32
  }
  func.func @transform_1(%arg0: i32) -> (i32, i32) {
    %c0_i32 = arith.constant 0 : i32
    %c0_i32_0 = arith.constant 0 : i32
    %c0_i32_1 = arith.constant 0 : i32
    return %c0_i32, %c0_i32_0 : i32, i32
  }
  func.func @transform_2(%arg0: i32) -> i32 {
    %c0_i32 = arith.constant 0 : i32
    %c0_i32_0 = arith.constant 0 : i32
    return %c0_i32 : i32
  }
  func.func @transform_3(%arg0: i32) -> (i32, i32) {
    %c0_i32 = arith.constant 0 : i32
    %c0_i32_0 = arith.constant 0 : i32
    return %arg0, %c0_i32 : i32, i32
  }
}

</mosaic_0001>

<llo_original>
// kernel: tpu_custom_call.1
$region0: #{tpu_custom_call.1}
  #allocation0 [shape = 'u32[]', space=smem, size = 0x4, offset = 0x4, fixed_abs, tag = 'smem constant byte address 0x4 - core index']
  #allocation1 [shape = 'u32[144,128]{1,0:T(1,128)}', space=vmem, size = 0x12000, scoped, tag = 'internal scratch']
  #allocation2 [shape = 'f32[1]{0:T(128)S(6)}', space=smem, size = 0x200, scoped, tag = 'scoped memory for tpu_custom_call.1']
  %s0 = inlined_call_operand.hbm [shape: f32[16,32], index: 0, kind: input, shape index: {}]
  %s1 = inlined_call_operand.vmem [shape: f32[1,32], index: 1, kind: input, shape index: {}]
  %s2 = inlined_call_operand.<no memory space> [shape: f32[1], index: 2, kind: input, shape index: {}]
  %s3 = inlined_call_operand.vmem [shape: f32[16,1], index: 3, kind: output, shape index: {}]
  %s4 = sld [smem:[#allocation0]]
  $region26: #{tpu_custom_call.1} parent=0
    _
  %s6 = ssub.s32 1, %s4
  %s7 = scalar_select 0, %s6, %s4
  %8 = sst [smem:[#allocation2]] %s2
  $region1: #{tpu_custom_call.1} parent=0
    #allocation3 [shape = 'u8[8192]{0}', space=vmem, size = 0x2000, scoped, tag = 'input window, operand 0, single buffered']
    #allocation4 [shape = 's32[1]{0}', space=sflag, size = 0x4, scoped, tag = 'scoped memory for tpu_custom_call.1']
    %9 = vsyncpa [#allocation4], 0
    // Predicated region
    $region2: #{tpu_custom_call.1} parent=1 // pred_check
      _
    $region3: #{tpu_custom_call.1} parent=1 // pred_check_branch
      %11 = sbr.rel (0) target = $region5
    $region4: #{tpu_custom_call.1} parent=1 // pred_region
      %s13 = ssub.s32 256, 256
      %14 = vsyncadd [#allocation4], %s13
      %s15 = sshll.u32 [#allocation3], 4
      %s16 = int_to_ptr.vmem [resolvable:$true] %s15
      %21 = dma.hbm_to_vmem [thread:$0]  %s0, 256, %s16, [#allocation4], 128, 128, 8
    $region5: #{tpu_custom_call.1} parent=1 // pred_fallthru
      _
    // Predicated region
    $region6: #{tpu_custom_call.1} parent=1 // pred_check
      _
    $region7: #{tpu_custom_call.1} parent=1 // pred_check_branch
      %23 = sbr.rel (0) target = $region9
    $region8: #{tpu_custom_call.1} parent=1 // pred_region
      _
    $region9: #{tpu_custom_call.1} parent=1 // pred_fallthru
      _
    // Predicated region
    $region10: #{tpu_custom_call.1} parent=1 // pred_check
      _
    $region11: #{tpu_custom_call.1} parent=1 // pred_check_branch
      %25 = sbr.rel (0) target = $region13
    $region12: #{tpu_custom_call.1} parent=1 // pred_region
      _
    $region13: #{tpu_custom_call.1} parent=1 // pred_fallthru
      _
    // Predicated region
    $region14: #{tpu_custom_call.1} parent=1 // pred_check
      _
    $region15: #{tpu_custom_call.1} parent=1 // pred_check_branch
      %27 = sbr.rel (0) target = $region17
    $region16: #{tpu_custom_call.1} parent=1 // pred_region
      %28 = dma.done [#allocation4], 256
    $region17: #{tpu_custom_call.1} parent=1 // pred_fallthru
      _
    %v29 = vld [vmem:[#allocation3] sm:$0xff]
    %v30 = vld [vmem:[#allocation3 + $0x8] sm:$0xff]
    %v31 = vld [vmem:[%s1] sm:$0x1]
    %v33 = vlaneseq
    %v34 = vshrl.u32 %v33, 7
    %v35 = vsub.s32 0, %v34
    %v36 = vrot.slane %v31, %v35
    %v38 = vmul.f32 %v29, %v36
    %v39 = vmul.f32 %v30, %v36
    %vm40 = vcmask 261120
    %v41 = vsel %vm40, %v38, 0.0
    %42 = vadd.xlane.f32.xlu0 %v41
    %v43 = vpop.xlane.xlu0 %42
    %v44 = vsel %vm40, %v39, 0.0
    %45 = vadd.xlane.f32.xlu0 %v44
    %v46 = vpop.xlane.xlu0 %45
    %s47 = sld [smem:[#allocation2]]
    %v48 = vstv %s47
    %v49 = vadd.f32 %v43, %v48
    %v50 = vadd.f32 %v46, %v48
    %vm51 = vcmask 7168
    %52 = vst.msk [vmem:[%s3] sm:$0xff] %vm51, %v49
    %53 = vst.msk [vmem:[%s3 + $0x8] sm:$0xff] %vm51, %v50
    // Predicated region
    $region18: #{tpu_custom_call.1} parent=1 // pred_check
      _
    $region19: #{tpu_custom_call.1} parent=1 // pred_check_branch
      %55 = sbr.rel (0) target = $region21
    $region20: #{tpu_custom_call.1} parent=1 // pred_region
      _
    $region21: #{tpu_custom_call.1} parent=1 // pred_fallthru
      _
    // Predicated region
    $region22: #{tpu_custom_call.1} parent=1 // pred_check
      _
    $region23: #{tpu_custom_call.1} parent=1 // pred_check_branch
      %57 = sbr.rel (0) target = $region25
    $region24: #{tpu_custom_call.1} parent=1 // pred_region
      _
    $region25: #{tpu_custom_call.1} parent=1 // pred_fallthru
      _
    %58 = vsyncpa [#allocation4], 1

</llo_original>
